<compile_context>
chip_gen: v5e
topology: v5e:2x2
jax: 0.10.0
libtpu: 0.0.40
codegen_flags: <defaults>
</compile_context>

<pallas_src>
import math

import jax
import jax.numpy as jnp
from jax.experimental import pallas as pl
from jax.experimental.pallas import tpu as pltpu

_SQRT_2_OVER_PI = math.sqrt(2.0 / math.pi)


def _gelu_tanh(h):
    # Exactly nn.GELU(approximate='tanh'), computed in f32.
    return 0.5 * h * (1.0 + jnp.tanh(_SQRT_2_OVER_PI * (h + 0.044715 * h * h * h)))


# --------------------------- resident-weights kernel -------------------------
# Grid: (row tiles i,).  W1/W2/b1/b2 have constant index_maps -> DMA'd once.
def mlp_kernel_resident(x_ref, w1_ref, b1_ref, w2_ref, b2_ref, o_ref):
    h = jnp.dot(x_ref[...], w1_ref[...], preferred_element_type=jnp.float32)
    h = _gelu_tanh(h + b1_ref[...])
    y = jnp.dot(h.astype(w2_ref.dtype), w2_ref[...],
                preferred_element_type=jnp.float32)
    o_ref[...] = (y + b2_ref[...]).astype(o_ref.dtype)


# --------------------------- streamed-weights kernel -------------------------
# Grid: (row tiles i, hidden tiles k).  Accumulator resident across k.
def mlp_kernel_streamed(x_ref, w1_ref, b1_ref, w2_ref, b2_ref, o_ref, acc_ref):
    k = pl.program_id(1)

    @pl.when(k == 0)
    def _init():
        acc_ref[...] = jnp.zeros_like(acc_ref)

    # c_fc tile: (tm, C) @ (C, tn) -> (tm, tn), f32 accumulation on the MXU.
    h = jnp.dot(x_ref[...], w1_ref[...], preferred_element_type=jnp.float32)
    h = _gelu_tanh(h + b1_ref[...])

    # c_proj partial: (tm, tn) @ (tn, C) -> (tm, C), accumulated over k.
    acc_ref[...] += jnp.dot(h.astype(w2_ref.dtype), w2_ref[...],
                            preferred_element_type=jnp.float32)

    @pl.when(k == pl.num_programs(1) - 1)
    def _finalize():
        # b2 is added exactly once, at the end of the reduction.
        o_ref[...] = (acc_ref[...] + b2_ref[...]).astype(o_ref.dtype)


# ------------------------------ helpers --------------------------------------
def _vmem_limit_bytes():
    """3/4 of physical VMEM (96 MiB on v5e/v6e, 48 MiB on v7x), safe fallback."""
    try:
        info = pltpu.get_tpu_info()
        cap = getattr(info, "vmem_capacity_bytes", None)
        if cap:
            return int(cap) * 3 // 4
    except Exception:
        pass
    return 48 * 1024 * 1024


def _choose_hidden_tile(H, desired):
    """Largest multiple of 128 that divides H and is <= desired (or H itself)."""
    if H <= desired or H % 128 != 0:
        return H
    t = (desired // 128) * 128
    while t >= 128:
        if H % t == 0:
            return t
        t -= 128
    return H


def _round16(v):
    return max(16, (v // 16) * 16)


# ------------------------------ wrapper ---------------------------------------
def mlp_pallas(x, w1, b1, w2, b2, *, tm=None, tn=1024, out_dtype=None,
               force_streaming=False):
    """x: (B, T, C). w1: (C, 4C), b1: (4C,), w2: (4C, C), b2: (C,).

    out_dtype defaults to x.dtype (module semantics); pass jnp.bfloat16 in a
    transformer stack to halve output HBM/VMEM traffic.
    """
    B, T, C = x.shape
    H = w1.shape[1]
    M = B * T
    out_dtype = out_dtype or x.dtype
    out_itemsize = jnp.dtype(out_dtype).itemsize

    vmem_limit = _vmem_limit_bytes()
    vmem_budget = int(0.8 * vmem_limit)
    weight_bytes = 2 * C * H * 2  # W1 + W2 in bf16

    resident = (not force_streaming) and (weight_bytes <= int(0.6 * vmem_limit))

    # ---- row tile: multiple of 16 (bf16 sublane packing), 256-multiples ideal.
    if tm is None:
        tm = 256 if resident else 1024
    tm_eff = _round16(min(tm, ((M + 15) // 16) * 16))

    def resident_footprint(tm_e):
        return (weight_bytes                       # W1 + W2 resident
                + 2 * tm_e * C * 2                 # x tile, double-buffered bf16
                + 2 * tm_e * C * out_itemsize      # out tile, double-buffered
                + tm_e * H * 4 + tm_e * C * 4      # f32 intermediates
                + 2 * (H + C) * 4)                 # biases

    def streamed_footprint(tm_e, tn_e):
        return (2 * (C * tn_e + tn_e * C) * 2      # W1/W2 tiles, double-buffered
                + 2 * tm_e * C * 2                 # x tile
                + 2 * tm_e * C * out_itemsize      # out tile
                + tm_e * C * 4                     # accumulator scratch
                + tm_e * tn_e * 4 + tm_e * C * 4   # f32 intermediates
                + 2 * (tn_e + C) * 4 * 2)          # bias tiles

    if resident:
        while tm_eff > 16 and resident_footprint(tm_eff) > vmem_budget:
            tm_eff = _round16(tm_eff - 16)
        if resident_footprint(tm_eff) > vmem_budget:
            resident = False  # fall back to streaming

    if not resident:
        tn_eff = _choose_hidden_tile(H, tn)
        while tm_eff > 16 and streamed_footprint(tm_eff, tn_eff) > vmem_budget:
            tm_eff = _round16(tm_eff - 16)
        k_steps = H // tn_eff

    m_steps = pl.cdiv(M, tm_eff)
    M_pad = m_steps * tm_eff

    # ---- operands: bf16 for the MXU, f32 biases.
    x2 = x.reshape(M, C)
    if M_pad != M:
        x2 = jnp.pad(x2, ((0, M_pad - M), (0, 0)))
    x2 = x2.astype(jnp.bfloat16)
    w1b = w1.astype(jnp.bfloat16)
    w2b = w2.astype(jnp.bfloat16)
    b1_2 = b1.reshape(1, H).astype(jnp.float32)
    b2_2 = b2.reshape(1, C).astype(jnp.float32)

    common_bytes = M_pad * C * 2 + (H + C) * 4 + M_pad * C * out_itemsize
    flops = 4 * M_pad * C * H

    if resident:
        out = pl.pallas_call(
            mlp_kernel_resident,
            out_shape=jax.ShapeDtypeStruct((M_pad, C), out_dtype),
            grid_spec=pltpu.PrefetchScalarGridSpec(
                num_scalar_prefetch=0,
                grid=(m_steps,),
                in_specs=[
                    pl.BlockSpec((tm_eff, C), lambda i: (i, 0)),  # x row tile
                    pl.BlockSpec((C, H), lambda i: (0, 0)),       # W1 resident
                    pl.BlockSpec((1, H), lambda i: (0, 0)),       # b1 resident
                    pl.BlockSpec((H, C), lambda i: (0, 0)),       # W2 resident
                    pl.BlockSpec((1, C), lambda i: (0, 0)),       # b2 resident
                ],
                out_specs=pl.BlockSpec((tm_eff, C), lambda i: (i, 0)),
            ),
            compiler_params=pltpu.CompilerParams(
                dimension_semantics=("parallel",),
                vmem_limit_bytes=vmem_limit,
            ),
            cost_estimate=pl.CostEstimate(
                flops=flops,
                transcendentals=M_pad * H,
                bytes_accessed=common_bytes + weight_bytes,
            ),
        )(x2, w1b, b1_2, w2b, b2_2)
    else:
        out = pl.pallas_call(
            mlp_kernel_streamed,
            out_shape=jax.ShapeDtypeStruct((M_pad, C), out_dtype),
            grid_spec=pltpu.PrefetchScalarGridSpec(
                num_scalar_prefetch=0,
                grid=(m_steps, k_steps),
                in_specs=[
                    pl.BlockSpec((tm_eff, C), lambda i, k: (i, 0)),   # x row tile
                    pl.BlockSpec((C, tn_eff), lambda i, k: (0, k)),   # W1 hidden tile
                    pl.BlockSpec((1, tn_eff), lambda i, k: (0, k)),   # b1 hidden tile
                    pl.BlockSpec((tn_eff, C), lambda i, k: (k, 0)),   # W2 hidden tile
                    pl.BlockSpec((1, C), lambda i, k: (0, 0)),        # b2 (full)
                ],
                out_specs=pl.BlockSpec((tm_eff, C), lambda i, k: (i, 0)),
                scratch_shapes=[pltpu.VMEM((tm_eff, C), jnp.float32)],
            ),
            compiler_params=pltpu.CompilerParams(
                dimension_semantics=("parallel", "arbitrary"),
                vmem_limit_bytes=vmem_limit,
            ),
            cost_estimate=pl.CostEstimate(
                flops=flops,
                transcendentals=M_pad * H,
                # Weights are re-streamed once per row tile under this structure.
                bytes_accessed=common_bytes + m_steps * weight_bytes,
            ),
        )(x2, w1b, b1_2, w2b, b2_2)

    if M_pad != M:
        out = out[:M]
    return out.reshape(B, T, C)


# ------------------------------ references ------------------------------------
def mlp_reference_f32(x, w1, b1, w2, b2):
    h = x @ w1 + b1
    h = 0.5 * h * (1.0 + jnp.tanh(_SQRT_2_OVER_PI * (h + 0.044715 * h ** 3)))
    return h @ w2 + b2


def mlp_reference_mixed(x, w1, b1, w2, b2):
    """Same math with the kernel's bf16-matmul / f32-accumulate precision."""
    B, T, C = x.shape
    xb = x.reshape(-1, C).astype(jnp.bfloat16)
    h = jnp.dot(xb, w1.astype(jnp.bfloat16),
                preferred_element_type=jnp.float32) + b1.astype(jnp.float32)
    h = 0.5 * h * (1.0 + jnp.tanh(_SQRT_2_OVER_PI * (h + 0.044715 * h ** 3)))
    y = jnp.dot(h.astype(jnp.bfloat16), w2.astype(jnp.bfloat16),
                preferred_element_type=jnp.float32) + b2.astype(jnp.float32)
    return y.reshape(B, T, C)


def _run_case(key, B, T, C, **kwargs):
    H = 4 * C
    kx, k1, k2, k3, k4 = jax.random.split(key, 5)
    x = jax.random.normal(kx, (B, T, C), dtype=jnp.float32)
    w1 = jax.random.normal(k1, (C, H), dtype=jnp.float32) * 0.02
    b1 = jax.random.normal(k2, (H,), dtype=jnp.float32) * 0.01
    w2 = jax.random.normal(k3, (H, C), dtype=jnp.float32) * 0.02
    b2 = jax.random.normal(k4, (C,), dtype=jnp.float32) * 0.01

    y = mlp_pallas(x, w1, b1, w2, b2, **kwargs)
    y = jax.block_until_ready(y)
    assert y.shape == (B, T, C)

    # Tight check against the same mixed-precision math in plain JAX.
    y_mixed = mlp_reference_mixed(x, w1, b1, w2, b2)
    assert jnp.allclose(y, y_mixed, atol=2e-3, rtol=2e-3), "mismatch vs mixed ref"

    # Loose semantic check against the pure-f32 PyTorch-equivalent reference
    # (difference is only the bf16 cast of the matmul operands).
    y_f32 = mlp_reference_f32(x, w1, b1, w2, b2)
    assert jnp.allclose(y, y_f32, atol=3e-2, rtol=3e-2), "mismatch vs f32 ref"


if __name__ == "__main__":
    key = jax.random.PRNGKey(0)
    k_a, k_b = jax.random.split(key)

    # Small GPT-ish config from the spec: batch=2, seq=8, n_embd=32 -> hidden=128.
    # Weights trivially fit VMEM -> exercises the resident-weights path.
    _run_case(k_a, B=2, T=8, C=32)

    # Larger config, streaming path forced: exercises the hidden-dim reduction
    # grid, multiple row tiles, and the row-padding path (M=120 -> 128).
    _run_case(k_b, B=2, T=60, C=128, tm=32, tn=128, force_streaming=True)

    print("KERNEL_OK")
</pallas_src>

<mosaic_0001>
module attributes {stable_mosaic.version = 11 : i64} {
  func.func @mlp_kernel_resident(%arg0: i32, %arg1: memref<16x32xbf16, #tpu.memory_space<vmem>>, %arg2: memref<32x128xbf16, #tpu.memory_space<vmem>>, %arg3: memref<1x128xf32, #tpu.memory_space<vmem>>, %arg4: memref<128x32xbf16, #tpu.memory_space<vmem>>, %arg5: memref<1x32xf32, #tpu.memory_space<vmem>>, %arg6: memref<16x32xf32, #tpu.memory_space<vmem>>) attributes {dimension_semantics = [#tpu.dimension_semantics<parallel>], iteration_bounds = array<i64: 1>, scalar_prefetch = 0 : i64, scratch_operands = 0 : i64, tpu.core_type = #tpu.core_type<tc>, window_params = [{transform_indices = @transform_0, window_bounds = array<i64: 16, 32>}, {pipeline_mode = #tpu.pipeline_mode<synchronous>, transform_indices = @transform_1, window_bounds = array<i64: 32, 128>}, {pipeline_mode = #tpu.pipeline_mode<synchronous>, transform_indices = @transform_2, window_bounds = array<i64: 1, 128>}, {pipeline_mode = #tpu.pipeline_mode<synchronous>, transform_indices = @transform_3, window_bounds = array<i64: 128, 32>}, {pipeline_mode = #tpu.pipeline_mode<synchronous>, transform_indices = @transform_4, window_bounds = array<i64: 1, 32>}, {transform_indices = @transform_5, window_bounds = array<i64: 16, 32>}]} {
    %c0 = arith.constant 0 : index
    %c0_0 = arith.constant 0 : index
    %0 = vector.load %arg1[%c0, %c0_0] : memref<16x32xbf16, #tpu.memory_space<vmem>>, vector<16x32xbf16>
    %c0_1 = arith.constant 0 : index
    %c0_2 = arith.constant 0 : index
    %1 = vector.load %arg2[%c0_1, %c0_2] : memref<32x128xbf16, #tpu.memory_space<vmem>>, vector<32x128xbf16>
    %cst = arith.constant dense<0.000000e+00> : vector<16x128xf32>
    %2 = tpu.matmul %0, %1, %cst {dimension_numbers = #tpu.dot_dimension_numbers<[1], [0], [0], [1], [0, 0, 1, 1], [], []>} : vector<16x32xbf16>, vector<32x128xbf16>, vector<16x128xf32> -> vector<16x128xf32>
    %c0_3 = arith.constant 0 : index
    %c0_4 = arith.constant 0 : index
    %3 = vector.load %arg3[%c0_3, %c0_4] : memref<1x128xf32, #tpu.memory_space<vmem>>, vector<1x128xf32>
    %4 = vector.broadcast %3 : vector<1x128xf32> to vector<16x128xf32>
    %5 = arith.addf %2, %4 : vector<16x128xf32>
    %cst_5 = arith.constant 5.000000e-01 : f32
    %6 = vector.broadcast %cst_5 : f32 to vector<16x128xf32>
    %7 = arith.mulf %6, %5 : vector<16x128xf32>
    %cst_6 = arith.constant 4.471500e-02 : f32
    %8 = vector.broadcast %cst_6 : f32 to vector<16x128xf32>
    %9 = arith.mulf %8, %5 : vector<16x128xf32>
    %10 = arith.mulf %9, %5 : vector<16x128xf32>
    %11 = arith.mulf %10, %5 : vector<16x128xf32>
    %12 = arith.addf %5, %11 : vector<16x128xf32>
    %cst_7 = arith.constant 0.797884583 : f32
    %13 = vector.broadcast %cst_7 : f32 to vector<16x128xf32>
    %14 = arith.mulf %13, %12 : vector<16x128xf32>
    %15 = math.tanh %14 : vector<16x128xf32>
    %cst_8 = arith.constant 1.000000e+00 : f32
    %16 = vector.broadcast %cst_8 : f32 to vector<16x128xf32>
    %17 = arith.addf %16, %15 : vector<16x128xf32>
    %18 = arith.mulf %7, %17 : vector<16x128xf32>
    %19 = arith.truncf %18 : vector<16x128xf32> to vector<16x128xbf16>
    %c0_9 = arith.constant 0 : index
    %c0_10 = arith.constant 0 : index
    %20 = vector.load %arg4[%c0_9, %c0_10] : memref<128x32xbf16, #tpu.memory_space<vmem>>, vector<128x32xbf16>
    %cst_11 = arith.constant dense<0.000000e+00> : vector<16x32xf32>
    %21 = tpu.matmul %19, %20, %cst_11 {dimension_numbers = #tpu.dot_dimension_numbers<[1], [0], [0], [1], [0, 0, 1, 1], [], []>} : vector<16x128xbf16>, vector<128x32xbf16>, vector<16x32xf32> -> vector<16x32xf32>
    %c0_12 = arith.constant 0 : index
    %c0_13 = arith.constant 0 : index
    %22 = vector.load %arg5[%c0_12, %c0_13] : memref<1x32xf32, #tpu.memory_space<vmem>>, vector<1x32xf32>
    %23 = vector.broadcast %22 : vector<1x32xf32> to vector<16x32xf32>
    %24 = arith.addf %21, %23 : vector<16x32xf32>
    %c0_14 = arith.constant 0 : index
    %c0_15 = arith.constant 0 : index
    %25 = vector.load %arg6[%c0_14, %c0_15] : memref<16x32xf32, #tpu.memory_space<vmem>>, vector<16x32xf32>
    tpu.vector_store %arg6[%c0_14, %c0_15], %24 {strides = array<i32>} : memref<16x32xf32, #tpu.memory_space<vmem>>, vector<16x32xf32>,
    return
  }
  func.func @transform_0(%arg0: i32) -> (i32, i32) {
    %c0_i32 = arith.constant 0 : i32
    %c0_i32_0 = arith.constant 0 : i32
    return %arg0, %c0_i32 : i32, i32
  }
  func.func @transform_1(%arg0: i32) -> (i32, i32) {
    %c0_i32 = arith.constant 0 : i32
    %c0_i32_0 = arith.constant 0 : i32
    %c0_i32_1 = arith.constant 0 : i32
    return %c0_i32, %c0_i32_0 : i32, i32
  }
  func.func @transform_2(%arg0: i32) -> (i32, i32) {
    %c0_i32 = arith.constant 0 : i32
    %c0_i32_0 = arith.constant 0 : i32
    %c0_i32_1 = arith.constant 0 : i32
    return %c0_i32, %c0_i32_0 : i32, i32
  }
  func.func @transform_3(%arg0: i32) -> (i32, i32) {
    %c0_i32 = arith.constant 0 : i32
    %c0_i32_0 = arith.constant 0 : i32
    %c0_i32_1 = arith.constant 0 : i32
    return %c0_i32, %c0_i32_0 : i32, i32
  }
  func.func @transform_4(%arg0: i32) -> (i32, i32) {
    %c0_i32 = arith.constant 0 : i32
    %c0_i32_0 = arith.constant 0 : i32
    %c0_i32_1 = arith.constant 0 : i32
    return %c0_i32, %c0_i32_0 : i32, i32
  }
  func.func @transform_5(%arg0: i32) -> (i32, i32) {
    %c0_i32 = arith.constant 0 : i32
    %c0_i32_0 = arith.constant 0 : i32
    return %arg0, %c0_i32 : i32, i32
  }
}

</mosaic_0001>

<llo_original>
// kernel: tpu_custom_call.1
$region0: #{tpu_custom_call.1}
  #allocation0 [shape = 'u32[]', space=smem, size = 0x4, offset = 0x4, fixed_abs, tag = 'smem constant byte address 0x4 - core index']
  #allocation1 [shape = 'u32[72,128]{1,0:T(1,128)}', space=vmem, size = 0x9000, scoped, tag = 'internal scratch']
  %s0 = inlined_call_operand.vmem [shape: bf16[16,32], index: 0, kind: input, shape index: {}]
  %s1 = inlined_call_operand.vmem [shape: bf16[32,128], index: 1, kind: input, shape index: {}]
  %s2 = inlined_call_operand.vmem [shape: f32[1,128], index: 2, kind: input, shape index: {}]
  %s3 = inlined_call_operand.vmem [shape: bf16[128,32], index: 3, kind: input, shape index: {}]
  %s4 = inlined_call_operand.vmem [shape: f32[1,32], index: 4, kind: input, shape index: {}]
  %s5 = inlined_call_operand.hbm [shape: f32[16,32], index: 5, kind: output, shape index: {}]
  %s6 = sld [smem:[#allocation0]]
  $region30: #{tpu_custom_call.1} parent=0
    _
  %s8 = ssub.s32 1, %s6
  %s9 = scalar_select 0, %s8, %s6
  $region1: #{tpu_custom_call.1} parent=0
    #allocation2 [shape = 'u8[8192]{0}', space=vmem, size = 0x2000, scoped, tag = 'output window, operand 0, single buffered']
    #allocation3 [shape = 's32[1]{0}', space=sflag, size = 0x4, scoped, tag = 'scoped memory for tpu_custom_call.1']
    %10 = vsyncpa [#allocation3], 0
    // Predicated region
    $region2: #{tpu_custom_call.1} parent=1 // pred_check
      _
    $region3: #{tpu_custom_call.1} parent=1 // pred_check_branch
      %12 = sbr.rel (0) target = $region5
    $region4: #{tpu_custom_call.1} parent=1 // pred_region
      _
    $region5: #{tpu_custom_call.1} parent=1 // pred_fallthru
      _
    // Predicated region
    $region6: #{tpu_custom_call.1} parent=1 // pred_check
      _
    $region7: #{tpu_custom_call.1} parent=1 // pred_check_branch
      %14 = sbr.rel (0) target = $region9
    $region8: #{tpu_custom_call.1} parent=1 // pred_region
      _
    $region9: #{tpu_custom_call.1} parent=1 // pred_fallthru
      _
    // Predicated region
    $region10: #{tpu_custom_call.1} parent=1 // pred_check
      _
    $region11: #{tpu_custom_call.1} parent=1 // pred_check_branch
      %16 = sbr.rel (0) target = $region13
    $region12: #{tpu_custom_call.1} parent=1 // pred_region
      _
    $region13: #{tpu_custom_call.1} parent=1 // pred_fallthru
      _
    // Predicated region
    $region14: #{tpu_custom_call.1} parent=1 // pred_check
      _
    $region15: #{tpu_custom_call.1} parent=1 // pred_check_branch
      %18 = sbr.rel (0) target = $region17
    $region16: #{tpu_custom_call.1} parent=1 // pred_region
      _
    $region17: #{tpu_custom_call.1} parent=1 // pred_fallthru
      _
    // Predicated region
    $region18: #{tpu_custom_call.1} parent=1 // pred_check
      _
    $region19: #{tpu_custom_call.1} parent=1 // pred_check_branch
      %20 = sbr.rel (0) target = $region21
    $region20: #{tpu_custom_call.1} parent=1 // pred_region
      _
    $region21: #{tpu_custom_call.1} parent=1 // pred_fallthru
      _
    %v22 = vld [vmem:[%s0] sm:$0xf]
    %v23 = vld [vmem:[%s0 + $0x4] sm:$0xf]
    %v24 = vld [vmem:[%s1] sm:$0xf]
    %v25 = vld [vmem:[%s1 + $0x4] sm:$0xf]
    %v26 = vld [vmem:[%s1 + $0x8] sm:$0xf]
    %v27 = vld [vmem:[%s1 + $0xc] sm:$0xf]
    %v28 = vld [vmem:[%s2] sm:$0x1]
    %v30 = vperm.slane %v28, 0
    %v34 = vunpack.c.l.b16 %v22
    %v35 = vunpack.c.l.b16 %v23
    %v36 = vpack.c.b16 %v35, %v34
    %v41 = vunpack.c.l.b16 %v24
    %v42 = vunpack.c.l.b16 %v25
    %v43 = vunpack.c.l.b16 %v26
    %v44 = vunpack.c.l.b16 %v27
    %v45 = vpack.c.b16 %v42, %v41
    %v46 = vpack.c.b16 %v44, %v43
    %vm49 = vcmask 261120
    %v51 = vsel %vm49, %v36, 0
    %53 = vmatpush.bf16.msra.mxu0 0
    %54 = vmatpush.bf16.msra.mxu0 0
    %55 = vmatpush.bf16.msra.mxu0 0
    %56 = vmatpush.bf16.msra.mxu0 0
    %57 = vmatpush.bf16.msra.mxu0 0
    %58 = vmatpush.bf16.msra.mxu0 0
    %59 = vmatpush.bf16.msra.mxu0 %v46
    %60 = vmatpush.bf16.msra.mxu0 %v45
    %61 = vmatmul.bf16.gmra.mxu0 %v51
    %v62 = vpop.f32.mrf.mxu0
    %v63 = vadd.f32 %v30, %v62
    %v64 = vpop.f32.mrf.mxu0
    %v65 = vadd.f32 %v30, %v64
    %66 = vdwg.mxu0
    %v67 = vmul.f32 %v63, 0.5
    %v68 = vmul.f32 %v65, 0.5
    %v69 = vmul.f32 %v63, 0.044715
    %v70 = vmul.f32 %v65, 0.044715
    %v71 = vmul.f32 %v69, %v63
    %v72 = vmul.f32 %v70, %v65
    %v73 = vmul.f32 %v71, %v63
    %v74 = vmul.f32 %v72, %v65
    %v75 = vadd.f32 %v63, %v73
    %v76 = vadd.f32 %v65, %v74
    %v77 = vmul.f32 %v75, 0.7978846
    %v78 = vmul.f32 %v76, 0.7978846
    %v79 = vtanh.pop %v77
    %v80 = vtanh.pop %v78
    %v81 = vadd.f32 %v79, 1.0
    %v82 = vadd.f32 %v80, 1.0
    %v83 = vmul.f32 %v67, %v81
    %v84 = vmul.f32 %v68, %v82
    %v85 = vpack.c.bf16 %v84, %v83
    %v86 = vld [vmem:[%s3] sm:$0xf]
    %v87 = vld [vmem:[%s3 + $0x4] sm:$0xf]
    %v88 = vld [vmem:[%s3 + $0x8] sm:$0xf]
    %v89 = vld [vmem:[%s3 + $0xc] sm:$0xf]
    %v90 = vld [vmem:[%s3 + $0x10] sm:$0xf]
    %v91 = vld [vmem:[%s3 + $0x14] sm:$0xf]
    %v92 = vld [vmem:[%s3 + $0x18] sm:$0xf]
    %v93 = vld [vmem:[%s3 + $0x1c] sm:$0xf]
    %v94 = vld [vmem:[%s3 + $0x20] sm:$0xf]
    %v95 = vld [vmem:[%s3 + $0x24] sm:$0xf]
    %v96 = vld [vmem:[%s3 + $0x28] sm:$0xf]
    %v97 = vld [vmem:[%s3 + $0x2c] sm:$0xf]
    %v98 = vld [vmem:[%s3 + $0x30] sm:$0xf]
    %v99 = vld [vmem:[%s3 + $0x34] sm:$0xf]
    %v100 = vld [vmem:[%s3 + $0x38] sm:$0xf]
    %v101 = vld [vmem:[%s3 + $0x3c] sm:$0xf]
    %v102 = vld [vmem:[%s4] sm:$0x1]
    %v104 = vperm.slane %v102, 0
    %v122 = vunpack.c.l.b16 %v86
    %v123 = vunpack.c.l.b16 %v87
    %v124 = vunpack.c.l.b16 %v88
    %v125 = vunpack.c.l.b16 %v89
    %v126 = vunpack.c.l.b16 %v90
    %v127 = vunpack.c.l.b16 %v91
    %v128 = vunpack.c.l.b16 %v92
    %v129 = vunpack.c.l.b16 %v93
    %v130 = vunpack.c.l.b16 %v94
    %v131 = vunpack.c.l.b16 %v95
    %v132 = vunpack.c.l.b16 %v96
    %v133 = vunpack.c.l.b16 %v97
    %v134 = vunpack.c.l.b16 %v98
    %v135 = vunpack.c.l.b16 %v99
    %v136 = vunpack.c.l.b16 %v100
    %v137 = vunpack.c.l.b16 %v101
    %v138 = vpack.c.b16 %v123, %v122
    %v139 = vpack.c.b16 %v125, %v124
    %v140 = vpack.c.b16 %v127, %v126
    %v141 = vpack.c.b16 %v129, %v128
    %v142 = vpack.c.b16 %v131, %v130
    %v143 = vpack.c.b16 %v133, %v132
    %v144 = vpack.c.b16 %v135, %v134
    %v145 = vpack.c.b16 %v137, %v136
    %154 = vmatpush.bf16.msra.mxu0 %v145
    %155 = vmatpush.bf16.msra.mxu0 %v144
    %156 = vmatpush.bf16.msra.mxu0 %v143
    %157 = vmatpush.bf16.msra.mxu0 %v142
    %158 = vmatpush.bf16.msra.mxu0 %v141
    %159 = vmatpush.bf16.msra.mxu0 %v140
    %160 = vmatpush.bf16.msra.mxu0 %v139
    %161 = vmatpush.bf16.msra.mxu0 %v138
    %162 = vmatmul.bf16.gmra.mxu0 %v85
    %v163 = vpop.f32.mrf.mxu0
    %v164 = vadd.f32 %v104, %v163
    %v165 = vpop.f32.mrf.mxu0
    %v166 = vadd.f32 %v104, %v165
    %167 = vdwg.mxu0
    %168 = vst.msk [vmem:[#allocation2] sm:$0xff] %vm49, %v164
    %169 = vst.msk [vmem:[#allocation2 + $0x8] sm:$0xff] %vm49, %v166
    // Predicated region
    $region22: #{tpu_custom_call.1} parent=1 // pred_check
      _
    $region23: #{tpu_custom_call.1} parent=1 // pred_check_branch
      %171 = sbr.rel (0) target = $region25
    $region24: #{tpu_custom_call.1} parent=1 // pred_region
      %173 = vsyncadd [#allocation3], 0
      %s174 = sshll.u32 [#allocation2], 4
      %s175 = int_to_ptr.vmem [resolvable:$true] %s174
      %s176 = sshll.u32 %s5, 4
      %s177 = int_to_ptr.hbm [resolvable:$true] %s176
      %182 = dma.vmem_to_hbm [thread:$0]  %s175, 256, %s177, [#allocation3], 128, 128, 8
    $region25: #{tpu_custom_call.1} parent=1 // pred_fallthru
      _
    // Predicated region
    $region26: #{tpu_custom_call.1} parent=1 // pred_check
      _
    $region27: #{tpu_custom_call.1} parent=1 // pred_check_branch
      %184 = sbr.rel (0) target = $region29
    $region28: #{tpu_custom_call.1} parent=1 // pred_region
      %186 = dma.done [#allocation3], 256
    $region29: #{tpu_custom_call.1} parent=1 // pred_fallthru
      _
    %187 = vsyncpa [#allocation3], 1

</llo_original>
